<compile_context>
chip_gen: v7x
topology: tpu7x:2x2x1
jax: 0.10.0
libtpu: 0.0.40
codegen_flags: <defaults>
</compile_context>

<pallas_src>
import jax
import jax.numpy as jnp
from jax.experimental import pallas as pl
from jax.experimental.pallas import tpu as pltpu

_LANE = 128
_SUBLANE = 8


def _round_up(x, m):
    return ((x + m - 1) // m) * m


def _mlp_kernel(x_ref, w1_ref, b1_ref, w2_ref, b2_ref, out_ref):
    # hidden = relu(x @ W1 + b1).  Cast x to the compute dtype in VMEM (cheap
    # convert, no HBM cost) so the MXU sees bf16 operands with f32 accumulation.
    x = x_ref[...].astype(w1_ref.dtype)
    h = jnp.dot(x, w1_ref[...], preferred_element_type=jnp.float32)
    h = jnp.maximum(h + b1_ref[...], 0.0)      # bias/ReLU kept in f32 (v5e: no bf16 VPU)
    # TODO(synk): dropout_FC defaults to 0 (and eval mode) -> identity, omitted.
    # logits = h @ W2 + b2
    o = jnp.dot(h.astype(w2_ref.dtype), w2_ref[...],
                preferred_element_type=jnp.float32)
    out_ref[...] = (o + b2_ref[...]).astype(out_ref.dtype)


def _physical_vmem_bytes():
    """Physical VMEM of the current chip; conservative fallback if unqueryable."""
    try:
        info = pltpu.get_tpu_info()
        cap = getattr(info, "vmem_capacity_bytes", None)
        if cap:
            return int(cap)
    except Exception:
        pass
    return 64 * 1024 * 1024   # v7x per-TensorCore VMEM (smallest of v5e/v6e/v7x)


def prepare_params(w1, b1, w2, b2, *, use_bf16=True):
    """Pad hidden/class dims to lane multiples and cast weights ONCE.

    w1: (n_features, n_hidden)  [pre-transposed vs. PyTorch's (out, in)]
    b1: (n_hidden,), w2: (n_hidden, n_classes), b2: (n_classes,)

    Call this once and reuse across nn_forward calls (weights never change
    between inference calls) -- hoists the per-call padding out of the hot path.
    """
    F, H = w1.shape
    C = w2.shape[1]
    Hp = _round_up(H, _LANE)
    Cp = _round_up(C, _LANE)
    wdt = jnp.bfloat16 if use_bf16 else jnp.float32
    # Zero padding of the H/C dims is numerically inert.
    w1p = jnp.zeros((F, Hp), wdt).at[:, :H].set(w1.astype(wdt))
    b1p = jnp.zeros((1, Hp), jnp.float32).at[0, :H].set(b1.astype(jnp.float32))
    w2p = jnp.zeros((Hp, Cp), wdt).at[:H, :C].set(w2.astype(wdt))
    b2p = jnp.zeros((1, Cp), jnp.float32).at[0, :C].set(b2.astype(jnp.float32))
    return {"w1": w1p, "b1": b1p, "w2": w2p, "b2": b2p,
            "n_features": F, "n_hidden": H, "n_classes": C}


def nn_forward(x, params, *, batch_tile=None, vmem_budget_bytes=24 * 1024 * 1024):
    """Forward pass of the NN module (eval mode).  x: (..., n_features)."""
    F = params["n_features"]
    C = params["n_classes"]
    x = x.reshape(-1, F)                       # matches x.view(-1, n_features)
    B = x.shape[0]

    w1p, b1p, w2p, b2p = params["w1"], params["b1"], params["w2"], params["b2"]
    Hp = w1p.shape[1]
    Cp = w2p.shape[1]

    x_bytes = jnp.dtype(x.dtype).itemsize
    w_bytes = jnp.dtype(w1p.dtype).itemsize
    out_dtype = x.dtype
    out_bytes = jnp.dtype(out_dtype).itemsize

    # ---- batch tile selection ------------------------------------------------
    if batch_tile is None:
        batch_tile = 2048                      # big tiles: per-step overhead << DMA
    # Keep >= ~4 grid steps when B allows it: software pipelining + megacore
    # sharding across v7x's two TensorCores.
    batch_tile = min(batch_tile, _round_up(pl.cdiv(B, 4), _SUBLANE))
    batch_tile = max(_SUBLANE, _round_up(batch_tile, _SUBLANE))

    # VMEM footprint estimate: double-buffered x/out tiles + hidden intermediate
    # + weights counted once (constant index_map -> fetched a single time).
    # The x block's minor dim is laid out lane-padded in VMEM, so budget with Fp.
    Fp_layout = _round_up(F, _LANE)

    def _footprint(bt):
        act = 2 * bt * Fp_layout * x_bytes + 2 * bt * Cp * out_bytes + bt * Hp * 4
        wts = (F * Hp + Hp * Cp) * w_bytes + (Hp + Cp) * 4
        return act + wts

    phys_vmem = _physical_vmem_bytes()
    vmem_budget_bytes = min(vmem_budget_bytes, int(0.6 * phys_vmem))
    while batch_tile > _SUBLANE and _footprint(batch_tile) > vmem_budget_bytes:
        batch_tile //= 2
    batch_tile = max(_SUBLANE, _round_up(batch_tile, _SUBLANE))

    grid = (pl.cdiv(B, batch_tile),)           # ragged last block clipped on write

    # Scoped-VMEM limit: 2x estimated footprint, clamped to physical VMEM with
    # headroom for Mosaic internal scratch (prevents over-asking on v7x's 64 MiB).
    vmem_limit = int(min(int(0.75 * phys_vmem),
                         max(2 * _footprint(batch_tile), 32 * 1024 * 1024)))

    cost = pl.CostEstimate(
        flops=2 * B * (F * Hp + Hp * Cp),
        transcendentals=0,
        bytes_accessed=(B * F * x_bytes                      # x in (un-padded)
                        + (F * Hp + Hp * Cp) * w_bytes       # resident weights
                        + (Hp + Cp) * 4                      # biases
                        + B * Cp * out_bytes),               # out
    )

    out = pl.pallas_call(
        _mlp_kernel,
        out_shape=jax.ShapeDtypeStruct((B, Cp), out_dtype),
        grid_spec=pl.GridSpec(
            grid=grid,
            in_specs=[
                # x: last dim == full array dim F (legal even if F % 128 != 0).
                pl.BlockSpec((batch_tile, F), lambda i: (i, 0)),
                pl.BlockSpec((F, Hp), lambda i: (0, 0)),     # resident W1
                pl.BlockSpec((1, Hp), lambda i: (0, 0)),     # resident b1
                pl.BlockSpec((Hp, Cp), lambda i: (0, 0)),    # resident W2
                pl.BlockSpec((1, Cp), lambda i: (0, 0)),     # resident b2
            ],
            out_specs=pl.BlockSpec((batch_tile, Cp), lambda i: (i, 0)),
        ),
        compiler_params=pltpu.CompilerParams(
            dimension_semantics=("parallel",),
            vmem_limit_bytes=vmem_limit,
        ),
        cost_estimate=cost,
    )(x, w1p, b1p, w2p, b2p)

    # Slice off the class-dim padding (batch dim is already exact).
    return out[:, :C]


def init_params(key, n_features, n_hidden, n_classes):
    """PyTorch-style Linear init: U(-1/sqrt(fan_in), 1/sqrt(fan_in)).
    Weights stored transposed: (in_features, out_features)."""
    k1, k2, k3, k4 = jax.random.split(key, 4)
    bound1 = 1.0 / jnp.sqrt(n_features)
    w1 = jax.random.uniform(k1, (n_features, n_hidden), jnp.float32, -bound1, bound1)
    b1 = jax.random.uniform(k2, (n_hidden,), jnp.float32, -bound1, bound1)
    bound2 = 1.0 / jnp.sqrt(n_hidden)
    w2 = jax.random.uniform(k3, (n_hidden, n_classes), jnp.float32, -bound2, bound2)
    b2 = jax.random.uniform(k4, (n_classes,), jnp.float32, -bound2, bound2)
    return w1, b1, w2, b2


def nn_forward_ref(x, w1, b1, w2, b2):
    h = jnp.maximum(x @ w1 + b1, 0.0)
    return h @ w2 + b2


if __name__ == "__main__":
    # Shapes consistent with the module's default config (n_hidden_FC=[10]):
    # x is already (batch, n_features) so x.view(-1, n_features) is the identity.
    B, F, H, C = 256, 32, 10, 8

    key = jax.random.PRNGKey(0)
    kx, kp = jax.random.split(key)
    x = jax.random.normal(kx, (B, F), jnp.float32)
    w1, b1, w2, b2 = init_params(kp, F, H, C)

    ref = nn_forward_ref(x, w1, b1, w2, b2)

    # Exactness check with f32 operands.
    params_f32 = prepare_params(w1, b1, w2, b2, use_bf16=False)
    out_f32 = jax.block_until_ready(nn_forward(x, params_f32))
    assert out_f32.shape == (B, C)
    assert jnp.allclose(out_f32, ref, atol=1e-5, rtol=1e-5), "f32 mismatch vs reference"

    # Default path: bf16 operands, f32 accumulation (looser tolerance).
    params = prepare_params(w1, b1, w2, b2)          # use_bf16=True (default)
    out = jax.block_until_ready(nn_forward(x, params))
    assert out.shape == (B, C)
    assert jnp.allclose(out, ref, atol=1e-1, rtol=1e-1), "bf16 mismatch vs reference"

    print("KERNEL_OK")
</pallas_src>

<mosaic_0001>
module attributes {stable_mosaic.version = 11 : i64} {
  func.func @_mlp_kernel(%arg0: i32, %arg1: memref<64x32xf32, #tpu.memory_space<vmem>>, %arg2: memref<32x128xf32, #tpu.memory_space<vmem>>, %arg3: memref<1x128xf32, #tpu.memory_space<vmem>>, %arg4: memref<128x128xf32, #tpu.memory_space<vmem>>, %arg5: memref<1x128xf32, #tpu.memory_space<vmem>>, %arg6: memref<64x128xf32, #tpu.memory_space<vmem>>) attributes {dimension_semantics = [#tpu.dimension_semantics<parallel>], iteration_bounds = array<i64: 4>, scalar_prefetch = 0 : i64, scratch_operands = 0 : i64, tpu.core_type = #tpu.core_type<tc>, window_params = [{transform_indices = @transform_0, window_bounds = array<i64: 64, 32>}, {pipeline_mode = #tpu.pipeline_mode<synchronous>, transform_indices = @transform_1, window_bounds = array<i64: 32, 128>}, {pipeline_mode = #tpu.pipeline_mode<synchronous>, transform_indices = @transform_2, window_bounds = array<i64: 1, 128>}, {pipeline_mode = #tpu.pipeline_mode<synchronous>, transform_indices = @transform_3, window_bounds = array<i64: 128, 128>}, {pipeline_mode = #tpu.pipeline_mode<synchronous>, transform_indices = @transform_4, window_bounds = array<i64: 1, 128>}, {transform_indices = @transform_5, window_bounds = array<i64: 64, 128>}]} {
    %c0 = arith.constant 0 : index
    %c0_0 = arith.constant 0 : index
    %0 = vector.load %arg1[%c0, %c0_0] : memref<64x32xf32, #tpu.memory_space<vmem>>, vector<64x32xf32>
    %c0_1 = arith.constant 0 : index
    %c0_2 = arith.constant 0 : index
    %1 = vector.load %arg2[%c0_1, %c0_2] : memref<32x128xf32, #tpu.memory_space<vmem>>, vector<32x128xf32>
    %cst = arith.constant dense<0.000000e+00> : vector<64x128xf32>
    %2 = tpu.matmul %0, %1, %cst {dimension_numbers = #tpu.dot_dimension_numbers<[1], [0], [0], [1], [0, 0, 1, 1], [], []>} : vector<64x32xf32>, vector<32x128xf32>, vector<64x128xf32> -> vector<64x128xf32>
    %c0_3 = arith.constant 0 : index
    %c0_4 = arith.constant 0 : index
    %3 = vector.load %arg3[%c0_3, %c0_4] : memref<1x128xf32, #tpu.memory_space<vmem>>, vector<1x128xf32>
    %4 = vector.broadcast %3 : vector<1x128xf32> to vector<64x128xf32>
    %5 = arith.addf %2, %4 : vector<64x128xf32>
    %cst_5 = arith.constant 0.000000e+00 : f32
    %6 = vector.broadcast %cst_5 : f32 to vector<64x128xf32>
    %7 = arith.maximumf %5, %6 : vector<64x128xf32>
    %c0_6 = arith.constant 0 : index
    %c0_7 = arith.constant 0 : index
    %8 = vector.load %arg4[%c0_6, %c0_7] : memref<128x128xf32, #tpu.memory_space<vmem>>, vector<128x128xf32>
    %cst_8 = arith.constant dense<0.000000e+00> : vector<64x128xf32>
    %9 = tpu.matmul %7, %8, %cst_8 {dimension_numbers = #tpu.dot_dimension_numbers<[1], [0], [0], [1], [0, 0, 1, 1], [], []>} : vector<64x128xf32>, vector<128x128xf32>, vector<64x128xf32> -> vector<64x128xf32>
    %c0_9 = arith.constant 0 : index
    %c0_10 = arith.constant 0 : index
    %10 = vector.load %arg5[%c0_9, %c0_10] : memref<1x128xf32, #tpu.memory_space<vmem>>, vector<1x128xf32>
    %11 = vector.broadcast %10 : vector<1x128xf32> to vector<64x128xf32>
    %12 = arith.addf %9, %11 : vector<64x128xf32>
    %c0_11 = arith.constant 0 : index
    %c0_12 = arith.constant 0 : index
    %13 = vector.load %arg6[%c0_11, %c0_12] : memref<64x128xf32, #tpu.memory_space<vmem>>, vector<64x128xf32>
    tpu.vector_store %arg6[%c0_11, %c0_12], %12 {strides = array<i32>} : memref<64x128xf32, #tpu.memory_space<vmem>>, vector<64x128xf32>,
    return
  }
  func.func @transform_0(%arg0: i32) -> (i32, i32) {
    %c0_i32 = arith.constant 0 : i32
    %c0_i32_0 = arith.constant 0 : i32
    return %arg0, %c0_i32 : i32, i32
  }
  func.func @transform_1(%arg0: i32) -> (i32, i32) {
    %c0_i32 = arith.constant 0 : i32
    %c0_i32_0 = arith.constant 0 : i32
    %c0_i32_1 = arith.constant 0 : i32
    return %c0_i32, %c0_i32_0 : i32, i32
  }
  func.func @transform_2(%arg0: i32) -> (i32, i32) {
    %c0_i32 = arith.constant 0 : i32
    %c0_i32_0 = arith.constant 0 : i32
    %c0_i32_1 = arith.constant 0 : i32
    return %c0_i32, %c0_i32_0 : i32, i32
  }
  func.func @transform_3(%arg0: i32) -> (i32, i32) {
    %c0_i32 = arith.constant 0 : i32
    %c0_i32_0 = arith.constant 0 : i32
    %c0_i32_1 = arith.constant 0 : i32
    return %c0_i32, %c0_i32_0 : i32, i32
  }
  func.func @transform_4(%arg0: i32) -> (i32, i32) {
    %c0_i32 = arith.constant 0 : i32
    %c0_i32_0 = arith.constant 0 : i32
    %c0_i32_1 = arith.constant 0 : i32
    return %c0_i32, %c0_i32_0 : i32, i32
  }
  func.func @transform_5(%arg0: i32) -> (i32, i32) {
    %c0_i32 = arith.constant 0 : i32
    %c0_i32_0 = arith.constant 0 : i32
    return %arg0, %c0_i32 : i32, i32
  }
}

</mosaic_0001>

<llo_original>
// kernel: tpu_custom_call.1
$region0: #{tpu_custom_call.1}
  #allocation0 [shape = 'u32[]', space=smem, size = 0x4, offset = 0x4, fixed_abs, tag = 'smem constant byte address 0x4 - core index']
  #allocation1 [shape = 'u32[144,128]{1,0:T(1,128)}', space=vmem, size = 0x12000, scoped, tag = 'internal scratch']
  %s0 = inlined_call_operand.vmem [shape: f32[256,32], index: 0, kind: input, shape index: {}]
  %s1 = inlined_call_operand.vmem [shape: f32[32,128], index: 1, kind: input, shape index: {}]
  %s2 = inlined_call_operand.vmem [shape: f32[1,128], index: 2, kind: input, shape index: {}]
  %s3 = inlined_call_operand.vmem [shape: f32[128,128], index: 3, kind: input, shape index: {}]
  %s4 = inlined_call_operand.vmem [shape: f32[1,128], index: 4, kind: input, shape index: {}]
  %s5 = inlined_call_operand.hbm [shape: f32[256,128], index: 5, kind: output, shape index: {}]
  %s6 = sld [smem:[#allocation0]]
  $region53: #{tpu_custom_call.1} parent=0
    _
  %s8 = ssub.s32 1, %s6
  %s9 = scalar_select 0, %s8, %s6
  $region1: #{tpu_custom_call.1} parent=0
    #allocation2 [shape = 'u8[65536]{0}', space=vmem, size = 0x10000, scoped, tag = 'output window, operand 0']
    #allocation3 [shape = 's32[2]{0}', space=sflag, size = 0x8, scoped, tag = 'scoped memory for tpu_custom_call.1']
    %10 = vsyncpa [#allocation3], 0
    %s11 = scalar_lea.sflag [#allocation3], 1
    %12 = vsyncpa %s11, 0
    loop: start=0, step=1, limit=6
    $region2: #{tpu_custom_call.1} parent=1 // loop_pre_header
      _
    $region3: #{tpu_custom_call.1} parent=1 // loop_header
      %s14 = sphi 0, %s18
      %p15 = scmp.ge.s32.totalorder %s14, 6
      %s24 = sphi 0, %s26
      %s27 = sphi 0, %s24
      %s28 = sphi 0, %s27
      %s44 = sphi 0, %s28
      %s48 = sphi 0, %s48
      %s50 = sphi 0, %s48
      %s51 = sphi 0, %s50
      %s65 = sphi 0, %s51
      %s69 = sphi 0, %s69
      %s71 = sphi 0, %s69
      %s72 = sphi 0, %s71
      %s86 = sphi 0, %s72
      %s90 = sphi 0, %s90
      %s92 = sphi 0, %s90
      %s93 = sphi 0, %s92
      %s107 = sphi 0, %s93
      %s111 = sphi 0, %s111
      %s113 = sphi 0, %s111
      %s114 = sphi 0, %s113
      %s128 = sphi 0, %s114
      %s134 = sphi 0, %s136
      %s137 = sphi 0, %s134
      %s138 = sphi 0, %s137
      %s154 = sphi 0, %s138
    $region4: #{tpu_custom_call.1} parent=1 // loop_header_branch
      %17 = sbr.rel (%p15) target = $region8
    $region5: #{tpu_custom_call.1} parent=1 // loop_body
      %s19 = ssub.s32 %s14, 1
      %s20 = ssub.s32 %s14, 2
      %s21 = sadd.s32 %s14, 1
      %s22 = ssub.s32 %s14, %s21
      %p23 = scmp.eq.s32.totalorder %s22, 0
      %s25 = sadd.s32 %s24, 1
      %s26 = scalar_select %p23, %s24, %s25
      %p29 = pneg %p23
      %p30 = scmp.eq.s32.totalorder %s14, 3
      %p31 = por %p29, %p30
      %p32 = scmp.ne.s32.totalorder %s24, %s27
      %p33 = scmp.eq.s32.totalorder %s14, 0
      %p34 = por %p32, %p33
      %p35 = scmp.ne.s32.totalorder %s24, %s27
      %p36 = scmp.eq.s32.totalorder %s19, 3
      %p37 = por %p35, %p36
      %p38 = scmp.ne.s32.totalorder %s27, %s28
      %p39 = scmp.eq.s32.totalorder %s19, 0
      %p40 = por %p38, %p39
      %p41 = scmp.ne.s32.totalorder %s27, %s28
      %p42 = scmp.eq.s32.totalorder %s20, 3
      %p43 = por %p41, %p42
      %p45 = scmp.ne.s32.totalorder %s28, %s44
      %p46 = scmp.eq.s32.totalorder %s20, 0
      %p47 = por %p45, %p46
      %s49 = sadd.s32 %s48, 1
      %p52 = scmp.eq.s32.totalorder %s14, 3
      %p53 = scmp.ne.s32.totalorder %s48, %s50
      %p54 = scmp.eq.s32.totalorder %s14, 0
      %p55 = por %p53, %p54
      %p56 = scmp.ne.s32.totalorder %s48, %s50
      %p57 = scmp.eq.s32.totalorder %s19, 3
      %p58 = por %p56, %p57
      %p59 = scmp.ne.s32.totalorder %s50, %s51
      %p60 = scmp.eq.s32.totalorder %s19, 0
      %p61 = por %p59, %p60
      %p62 = scmp.ne.s32.totalorder %s50, %s51
      %p63 = scmp.eq.s32.totalorder %s20, 3
      %p64 = por %p62, %p63
      %p66 = scmp.ne.s32.totalorder %s51, %s65
      %p67 = scmp.eq.s32.totalorder %s20, 0
      %p68 = por %p66, %p67
      %s70 = sadd.s32 %s69, 1
      %p73 = scmp.eq.s32.totalorder %s14, 3
      %p74 = scmp.ne.s32.totalorder %s69, %s71
      %p75 = scmp.eq.s32.totalorder %s14, 0
      %p76 = por %p74, %p75
      %p77 = scmp.ne.s32.totalorder %s69, %s71
      %p78 = scmp.eq.s32.totalorder %s19, 3
      %p79 = por %p77, %p78
      %p80 = scmp.ne.s32.totalorder %s71, %s72
      %p81 = scmp.eq.s32.totalorder %s19, 0
      %p82 = por %p80, %p81
      %p83 = scmp.ne.s32.totalorder %s71, %s72
      %p84 = scmp.eq.s32.totalorder %s20, 3
      %p85 = por %p83, %p84
      %p87 = scmp.ne.s32.totalorder %s72, %s86
      %p88 = scmp.eq.s32.totalorder %s20, 0
      %p89 = por %p87, %p88
      %s91 = sadd.s32 %s90, 1
      %p94 = scmp.eq.s32.totalorder %s14, 3
      %p95 = scmp.ne.s32.totalorder %s90, %s92
      %p96 = scmp.eq.s32.totalorder %s14, 0
      %p97 = por %p95, %p96
      %p98 = scmp.ne.s32.totalorder %s90, %s92
      %p99 = scmp.eq.s32.totalorder %s19, 3
      %p100 = por %p98, %p99
      %p101 = scmp.ne.s32.totalorder %s92, %s93
      %p102 = scmp.eq.s32.totalorder %s19, 0
      %p103 = por %p101, %p102
      %p104 = scmp.ne.s32.totalorder %s92, %s93
      %p105 = scmp.eq.s32.totalorder %s20, 3
      %p106 = por %p104, %p105
      %p108 = scmp.ne.s32.totalorder %s93, %s107
      %p109 = scmp.eq.s32.totalorder %s20, 0
      %p110 = por %p108, %p109
      %s112 = sadd.s32 %s111, 1
      %p115 = scmp.eq.s32.totalorder %s14, 3
      %p116 = scmp.ne.s32.totalorder %s111, %s113
      %p117 = scmp.eq.s32.totalorder %s14, 0
      %p118 = por %p116, %p117
      %p119 = scmp.ne.s32.totalorder %s111, %s113
      %p120 = scmp.eq.s32.totalorder %s19, 3
      %p121 = por %p119, %p120
      %p122 = scmp.ne.s32.totalorder %s113, %s114
      %p123 = scmp.eq.s32.totalorder %s19, 0
      %p124 = por %p122, %p123
      %p125 = scmp.ne.s32.totalorder %s113, %s114
      %p126 = scmp.eq.s32.totalorder %s20, 3
      %p127 = por %p125, %p126
      %p129 = scmp.ne.s32.totalorder %s114, %s128
      %p130 = scmp.eq.s32.totalorder %s20, 0
      %p131 = por %p129, %p130
      %s132 = ssub.s32 %s14, %s21
      %p133 = scmp.eq.s32.totalorder %s132, 0
      %s135 = sadd.s32 %s134, 1
      %s136 = scalar_select %p133, %s134, %s135
      %p139 = pneg %p133
      %p140 = scmp.eq.s32.totalorder %s14, 3
      %p141 = por %p139, %p140
      %p142 = scmp.ne.s32.totalorder %s134, %s137
      %p143 = scmp.eq.s32.totalorder %s14, 0
      %p144 = por %p142, %p143
      %p145 = scmp.ne.s32.totalorder %s134, %s137
      %p146 = scmp.eq.s32.totalorder %s19, 3
      %p147 = por %p145, %p146
      %p148 = scmp.ne.s32.totalorder %s137, %s138
      %p149 = scmp.eq.s32.totalorder %s19, 0
      %p150 = por %p148, %p149
      %p151 = scmp.ne.s32.totalorder %s137, %s138
      %p152 = scmp.eq.s32.totalorder %s20, 3
      %p153 = por %p151, %p152
      %p155 = scmp.ne.s32.totalorder %s138, %s154
      %p156 = scmp.eq.s32.totalorder %s20, 0
      %p157 = por %p155, %p156
      %p158 = scmp.le.s32.totalorder 1, %s14
      %p159 = scmp.lt.s32.totalorder %s14, 5
      %p160 = pnand %p158, %p159
      %p161 = pneg %p160
      // Predicated region
      $region9: #{tpu_custom_call.1} parent=5 // pred_check
        _
      $region10: #{tpu_custom_call.1} parent=5 // pred_check_branch
        %163 = sbr.rel (%p160) target = $region12
      $region11: #{tpu_custom_call.1} parent=5 // pred_region
        %s164 = ssub.s32 %s14, 1
        // Predicated region
        $region13: #{tpu_custom_call.1} parent=11 // pred_check
          %p165 = pneg %p61
        $region14: #{tpu_custom_call.1} parent=11 // pred_check_branch
          %167 = sbr.rel (%p165) target = $region16
        $region15: #{tpu_custom_call.1} parent=11 // pred_region
          _
        $region16: #{tpu_custom_call.1} parent=11 // pred_fallthru
          _
        // Predicated region
        $region17: #{tpu_custom_call.1} parent=11 // pred_check
          %p168 = pneg %p82
        $region18: #{tpu_custom_call.1} parent=11 // pred_check_branch
          %170 = sbr.rel (%p168) target = $region20
        $region19: #{tpu_custom_call.1} parent=11 // pred_region
          _
        $region20: #{tpu_custom_call.1} parent=11 // pred_fallthru
          _
        // Predicated region
        $region21: #{tpu_custom_call.1} parent=11 // pred_check
          %p171 = pneg %p103
        $region22: #{tpu_custom_call.1} parent=11 // pred_check_branch
          %173 = sbr.rel (%p171) target = $region24
        $region23: #{tpu_custom_call.1} parent=11 // pred_region
          _
        $region24: #{tpu_custom_call.1} parent=11 // pred_fallthru
          _
        // Predicated region
        $region25: #{tpu_custom_call.1} parent=11 // pred_check
          %p174 = pneg %p124
        $region26: #{tpu_custom_call.1} parent=11 // pred_check_branch
          %176 = sbr.rel (%p174) target = $region28
        $region27: #{tpu_custom_call.1} parent=11 // pred_region
          _
        $region28: #{tpu_custom_call.1} parent=11 // pred_fallthru
          _
      $region12: #{tpu_custom_call.1} parent=5 // pred_fallthru
        _
      %p177 = scmp.lt.s32.totalorder %s14, 4
      // Predicated region
      $region29: #{tpu_custom_call.1} parent=5 // pred_check
        %p178 = pneg %p177
      $region30: #{tpu_custom_call.1} parent=5 // pred_check_branch
        %180 = sbr.rel (%p178) target = $region32
      $region31: #{tpu_custom_call.1} parent=5 // pred_region
        // Predicated region
        $region33: #{tpu_custom_call.1} parent=31 // pred_check
          %p181 = pneg %p34
        $region34: #{tpu_custom_call.1} parent=31 // pred_check_branch
          %183 = sbr.rel (%p181) target = $region36
        $region35: #{tpu_custom_call.1} parent=31 // pred_region
          %s184 = smul.u32 8, %s14
          %p185 = scmp.lt.s32.totalorder %s184, 31
          %s186 = scalar_select %p185, %s184, 31
          %s187 = smul.addr %s186, 8
          %s188 = scalar_lea.vmem %s0, %s187
          %s189 = smul.u32 8, %s14
        $region36: #{tpu_custom_call.1} parent=31 // pred_fallthru
          _
      $region32: #{tpu_custom_call.1} parent=5 // pred_fallthru
        _
      %p190 = scmp.le.s32.totalorder 1, %s14
      %p191 = scmp.lt.s32.totalorder %s14, 5
      %p192 = pnand %p190, %p191
      %p193 = pneg %p192
      // Predicated region
      $region37: #{tpu_custom_call.1} parent=5 // pred_check
        _
      $region38: #{tpu_custom_call.1} parent=5 // pred_check_branch
        %195 = sbr.rel (%p192) target = $region40
      $region39: #{tpu_custom_call.1} parent=5 // pred_region
        %s196 = ssub.s32 %s14, 1
        %s197 = smul.u32 8, %s19
        %p198 = scmp.lt.s32.totalorder %s197, 31
        %s199 = scalar_select %p198, %s197, 31
        %s200 = smul.addr %s199, 8
        %s201 = scalar_lea.vmem %s0, %s200
        %p202 = pneg %p40
        %p203 = pneg %p37
        %p204 = pneg %p61
        %p205 = pneg %p58
        %p206 = pneg %p82
        %p207 = pneg %p79
        %p208 = pneg %p103
        %p209 = pneg %p100
        %p210 = pneg %p124
        %p211 = pneg %p121
        %p212 = pneg %p150
        %p213 = pneg %p147
        %s214 = sand.u32 %s137, 1
        %s215 = scalar_lea.sflag [#allocation3], %s214
        %s216 = sand.u32 %s137, 1
        %s217 = smul.addr %s216, 64
        %s218 = scalar_lea.vmem [#allocation2], %s217
        %s219 = smul.u32 8, %s19
        %p220 = scmp.lt.s32.totalorder %s219, 31
        %s221 = scalar_select %p220, %s219, 31
        %s222 = smul.addr %s221, 8
        %s223 = scalar_lea.vmem %s0, %s222
        %s224 = smul.u32 8, %s19
        %s225 = smul.u32 8, %s19
        %v226 = vld [vmem:[%s223] sm:$0xff]
        %v227 = vld [vmem:[%s223 + $0x8] sm:$0xff]
        %v228 = vld [vmem:[%s223 + $0x10] sm:$0xff]
        %v229 = vld [vmem:[%s223 + $0x18] sm:$0xff]
        %v230 = vld [vmem:[%s223 + $0x20] sm:$0xff]
        %v231 = vld [vmem:[%s223 + $0x28] sm:$0xff]
        %v232 = vld [vmem:[%s223 + $0x30] sm:$0xff]
        %v233 = vld [vmem:[%s223 + $0x38] sm:$0xff]
        %v234 = vld [vmem:[%s1] sm:$0xff]
        %v235 = vld [vmem:[%s1 + $0x8] sm:$0xff]
        %v236 = vld [vmem:[%s1 + $0x10] sm:$0xff]
        %v237 = vld [vmem:[%s1 + $0x18] sm:$0xff]
        %v238 = vld [vmem:[%s2] sm:$0x1]
        %v240 = vlaneseq
        %v241 = vshrl.u32 %v240, 7
        %v242 = vsub.s32 0, %v241
        %v243 = vrot.slane %v238, %v242
        %vm245 = vcmask 261120
        %v247 = vsel %vm245, %v226, 0
        %v250 = vsel %vm245, %v227, 0
        %v253 = vsel %vm245, %v228, 0
        %v256 = vsel %vm245, %v229, 0
        %v259 = vsel %vm245, %v230, 0
        %v262 = vsel %vm245, %v231, 0
        %v265 = vsel %vm245, %v232, 0
        %v268 = vsel %vm245, %v233, 0
        %270 = vmatprep.subr.mxu0 0.0
        %271 = vmatpush1.msra.mxu0 %v234
        %272 = vmatprep.subr.mxu0 0.0
        %273 = vmatpush1.msra.mxu0 %v235
        %274 = vmatprep.subr.mxu0 0.0
        %275 = vmatpush1.msra.mxu0 %v236
        %276 = vmatprep.subr.mxu0 0.0
        %277 = vmatpush1.msra.mxu0 %v237
        %278 = vmatprep.subr.mxu0 0.0
        %279 = vmatpush1.msra.mxu0 0.0
        %280 = vmatprep.subr.mxu0 0.0
        %281 = vmatpush1.msra.mxu0 0.0
        %282 = vmatprep.subr.mxu0 0.0
        %283 = vmatpush1.msra.mxu0 0.0
        %284 = vmatprep.subr.mxu0 0.0
        %285 = vmatpush1.msra.mxu0 0.0
        %286 = vmatprep.subr.mxu0 0.0
        %287 = vmatpush1.msra.mxu0 0.0
        %288 = vmatprep.subr.mxu0 0.0
        %289 = vmatpush1.msra.mxu0 0.0
        %290 = vmatprep.subr.mxu0 0.0
        %291 = vmatpush1.msra.mxu0 0.0
        %292 = vmatprep.subr.mxu0 0.0
        %293 = vmatpush1.msra.mxu0 0.0
        %294 = vmatprep.subr.mxu0 0.0
        %295 = vmatpush1.msra.mxu0 0.0
        %296 = vmatprep.subr.mxu0 0.0
        %297 = vmatpush1.msra.mxu0 0.0
        %298 = vmatprep.subr.mxu0 0.0
        %299 = vmatpush1.msra.mxu0 0.0
        %300 = vmatprep.subr.mxu0 0.0
        %301 = vmatpush1.msra.mxu0 0.0
        %302 = vmatprep.subr.mxu0 0.0
        %303 = vmatpush1.msra.mxu0 0.0
        %304 = vmatprep.subr.mxu0 0.0
        %305 = vmatpush1.msra.mxu0 0.0
        %306 = vmatprep.subr.mxu0 0.0
        %307 = vmatpush1.msra.mxu0 0.0
        %308 = vmatprep.subr.mxu0 0.0
        %309 = vmatpush1.msra.mxu0 0.0
        %310 = vmatprep.subr.mxu0 0.0
        %311 = vmatpush1.msra.mxu0 0.0
        %312 = vmatprep.subr.mxu0 0.0
        %313 = vmatpush1.msra.mxu0 0.0
        %314 = vmatprep.subr.mxu0 0.0
        %315 = vmatpush1.msra.mxu0 0.0
        %316 = vmatprep.subr.mxu0 0.0
        %317 = vmatpush1.msra.mxu0 0.0
        %318 = vmatprep.subr.mxu0 0.0
        %319 = vmatpush1.msra.mxu0 0.0
        %320 = vmatprep.subr.mxu0 0.0
        %321 = vmatpush1.msra.mxu0 0.0
        %322 = vmatprep.subr.mxu0 0.0
        %323 = vmatpush1.msra.mxu0 0.0
        %324 = vmatprep.subr.mxu0 0.0
        %325 = vmatpush1.msra.mxu0 0.0
        %326 = vmatprep.subr.mxu0 0.0
        %327 = vmatpush1.msra.mxu0 0.0
        %328 = vmatprep.subr.mxu0 0.0
        %329 = vmatpush1.msra.mxu0 0.0
        %330 = vmatprep.subr.mxu0 0.0
        %331 = vmatpush1.msra.mxu0 0.0
        %332 = vmatprep.subr.mxu0 0.0
        %333 = vmatpush1.msra.mxu0 0.0
        %334 = vmatprep.mubr.f32.mxu0 0.0
        %335 = vmatmul.mubr.f32.gmra.mrb[0].mxu0 %v247
        %v336 = vpop.f32.mrb[0].mxu0
        %v337 = vadd.f32 %v243, %v336
        %v338 = vpop.f32.mrb[0].mxu0
        %339 = vmatprep.mubr.f32.mxu0 0.0
        %340 = vmatmul.mubr.f32.gmra.mrb[0].mxu0 %v250
        %v341 = vpop.f32.mrb[0].mxu0
        %v342 = vadd.f32 %v243, %v341
        %v343 = vpop.f32.mrb[0].mxu0
        %344 = vmatprep.mubr.f32.mxu0 0.0
        %345 = vmatmul.mubr.f32.gmra.mrb[0].mxu0 %v253
        %v346 = vpop.f32.mrb[0].mxu0
        %v347 = vadd.f32 %v243, %v346
        %v348 = vpop.f32.mrb[0].mxu0
        %349 = vmatprep.mubr.f32.mxu0 0.0
        %350 = vmatmul.mubr.f32.gmra.mrb[0].mxu0 %v256
        %v351 = vpop.f32.mrb[0].mxu0
        %v352 = vadd.f32 %v243, %v351
        %v353 = vpop.f32.mrb[0].mxu0
        %354 = vmatprep.mubr.f32.mxu0 0.0
        %355 = vmatmul.mubr.f32.gmra.mrb[0].mxu0 %v259
        %v356 = vpop.f32.mrb[0].mxu0
        %v357 = vadd.f32 %v243, %v356
        %v358 = vpop.f32.mrb[0].mxu0
        %359 = vmatprep.mubr.f32.mxu0 0.0
        %360 = vmatmul.mubr.f32.gmra.mrb[0].mxu0 %v262
        %v361 = vpop.f32.mrb[0].mxu0
        %v362 = vadd.f32 %v243, %v361
        %v363 = vpop.f32.mrb[0].mxu0
        %364 = vmatprep.mubr.f32.mxu0 0.0
        %365 = vmatmul.mubr.f32.gmra.mrb[0].mxu0 %v265
        %v366 = vpop.f32.mrb[0].mxu0
        %v367 = vadd.f32 %v243, %v366
        %v368 = vpop.f32.mrb[0].mxu0
        %369 = vmatprep.mubr.f32.mxu0 0.0
        %370 = vmatmul.mubr.f32.gmra.mrb[0].mxu0 %v268
        %v371 = vpop.f32.mrb[0].mxu0
        %v372 = vadd.f32 %v243, %v371
        %v373 = vpop.f32.mrb[0].mxu0
        %374 = vdwg.mxu0
        %v375 = vmax.f32 %v337, 0.0
        %v376 = vmax.f32 %v342, 0.0
        %v377 = vmax.f32 %v347, 0.0
        %v378 = vmax.f32 %v352, 0.0
        %v379 = vmax.f32 %v357, 0.0
        %v380 = vmax.f32 %v362, 0.0
        %v381 = vmax.f32 %v367, 0.0
        %v382 = vmax.f32 %v372, 0.0
        %v383 = vld [vmem:[%s3] sm:$0xff]
        %v384 = vld [vmem:[%s3 + $0x8] sm:$0xff]
        %v385 = vld [vmem:[%s3 + $0x10] sm:$0xff]
        %v386 = vld [vmem:[%s3 + $0x18] sm:$0xff]
        %v387 = vld [vmem:[%s3 + $0x20] sm:$0xff]
        %v388 = vld [vmem:[%s3 + $0x28] sm:$0xff]
        %v389 = vld [vmem:[%s3 + $0x30] sm:$0xff]
        %v390 = vld [vmem:[%s3 + $0x38] sm:$0xff]
        %v391 = vld [vmem:[%s3 + $0x40] sm:$0xff]
        %v392 = vld [vmem:[%s3 + $0x48] sm:$0xff]
        %v393 = vld [vmem:[%s3 + $0x50] sm:$0xff]
        %v394 = vld [vmem:[%s3 + $0x58] sm:$0xff]
        %v395 = vld [vmem:[%s3 + $0x60] sm:$0xff]
        %v396 = vld [vmem:[%s3 + $0x68] sm:$0xff]
        %v397 = vld [vmem:[%s3 + $0x70] sm:$0xff]
        %v398 = vld [vmem:[%s3 + $0x78] sm:$0xff]
        %v399 = vld [vmem:[%s4] sm:$0x1]
        %v401 = vlaneseq
        %v402 = vshrl.u32 %v401, 7
        %v403 = vsub.s32 0, %v402
        %v404 = vrot.slane %v399, %v403
        %406 = vmatprep.subr.mxu0 0.0
        %407 = vmatpush1.msra.mxu0 %v383
        %408 = vmatprep.subr.mxu0 0.0
        %409 = vmatpush1.msra.mxu0 %v384
        %410 = vmatprep.subr.mxu0 0.0
        %411 = vmatpush1.msra.mxu0 %v385
        %412 = vmatprep.subr.mxu0 0.0
        %413 = vmatpush1.msra.mxu0 %v386
        %414 = vmatprep.subr.mxu0 0.0
        %415 = vmatpush1.msra.mxu0 %v387
        %416 = vmatprep.subr.mxu0 0.0
        %417 = vmatpush1.msra.mxu0 %v388
        %418 = vmatprep.subr.mxu0 0.0
        %419 = vmatpush1.msra.mxu0 %v389
        %420 = vmatprep.subr.mxu0 0.0
        %421 = vmatpush1.msra.mxu0 %v390
        %422 = vmatprep.subr.mxu0 0.0
        %423 = vmatpush1.msra.mxu0 %v391
        %424 = vmatprep.subr.mxu0 0.0
        %425 = vmatpush1.msra.mxu0 %v392
        %426 = vmatprep.subr.mxu0 0.0
        %427 = vmatpush1.msra.mxu0 %v393
        %428 = vmatprep.subr.mxu0 0.0
        %429 = vmatpush1.msra.mxu0 %v394
        %430 = vmatprep.subr.mxu0 0.0
        %431 = vmatpush1.msra.mxu0 %v395
        %432 = vmatprep.subr.mxu0 0.0
        %433 = vmatpush1.msra.mxu0 %v396
        %434 = vmatprep.subr.mxu0 0.0
        %435 = vmatpush1.msra.mxu0 %v397
        %436 = vmatprep.subr.mxu0 0.0
        %437 = vmatpush1.msra.mxu0 %v398
        %438 = vmatprep.subr.mxu0 0.0
        %439 = vmatpush1.msra.mxu0 0.0
        %440 = vmatprep.subr.mxu0 0.0
        %441 = vmatpush1.msra.mxu0 0.0
        %442 = vmatprep.subr.mxu0 0.0
        %443 = vmatpush1.msra.mxu0 0.0
        %444 = vmatprep.subr.mxu0 0.0
        %445 = vmatpush1.msra.mxu0 0.0
        %446 = vmatprep.subr.mxu0 0.0
        %447 = vmatpush1.msra.mxu0 0.0
        %448 = vmatprep.subr.mxu0 0.0
        %449 = vmatpush1.msra.mxu0 0.0
        %450 = vmatprep.subr.mxu0 0.0
        %451 = vmatpush1.msra.mxu0 0.0
        %452 = vmatprep.subr.mxu0 0.0
        %453 = vmatpush1.msra.mxu0 0.0
        %454 = vmatprep.subr.mxu0 0.0
        %455 = vmatpush1.msra.mxu0 0.0
        %456 = vmatprep.subr.mxu0 0.0
        %457 = vmatpush1.msra.mxu0 0.0
        %458 = vmatprep.subr.mxu0 0.0
        %459 = vmatpush1.msra.mxu0 0.0
        %460 = vmatprep.subr.mxu0 0.0
        %461 = vmatpush1.msra.mxu0 0.0
        %462 = vmatprep.subr.mxu0 0.0
        %463 = vmatpush1.msra.mxu0 0.0
        %464 = vmatprep.subr.mxu0 0.0
        %465 = vmatpush1.msra.mxu0 0.0
        %466 = vmatprep.subr.mxu0 0.0
        %467 = vmatpush1.msra.mxu0 0.0
        %468 = vmatprep.subr.mxu0 0.0
        %469 = vmatpush1.msra.mxu0 0.0
        %470 = vmatprep.mubr.f32.mxu0 0.0
        %471 = vmatmul.mubr.f32.gmra.mrb[0].mxu0 %v375
        %v472 = vpop.f32.mrb[0].mxu0
        %v473 = vadd.f32 %v404, %v472
        %v474 = vpop.f32.mrb[0].mxu0
        %475 = vmatprep.mubr.f32.mxu0 0.0
        %476 = vmatmul.mubr.f32.gmra.mrb[0].mxu0 %v376
        %v477 = vpop.f32.mrb[0].mxu0
        %v478 = vadd.f32 %v404, %v477
        %v479 = vpop.f32.mrb[0].mxu0
        %480 = vmatprep.mubr.f32.mxu0 0.0
        %481 = vmatmul.mubr.f32.gmra.mrb[0].mxu0 %v377
        %v482 = vpop.f32.mrb[0].mxu0
        %v483 = vadd.f32 %v404, %v482
        %v484 = vpop.f32.mrb[0].mxu0
        %485 = vmatprep.mubr.f32.mxu0 0.0
        %486 = vmatmul.mubr.f32.gmra.mrb[0].mxu0 %v378
        %v487 = vpop.f32.mrb[0].mxu0
        %v488 = vadd.f32 %v404, %v487
        %v489 = vpop.f32.mrb[0].mxu0
        %490 = vmatprep.mubr.f32.mxu0 0.0
        %491 = vmatmul.mubr.f32.gmra.mrb[0].mxu0 %v379
        %v492 = vpop.f32.mrb[0].mxu0
        %v493 = vadd.f32 %v404, %v492
        %v494 = vpop.f32.mrb[0].mxu0
        %495 = vmatprep.mubr.f32.mxu0 0.0
        %496 = vmatmul.mubr.f32.gmra.mrb[0].mxu0 %v380
        %v497 = vpop.f32.mrb[0].mxu0
        %v498 = vadd.f32 %v404, %v497
        %v499 = vpop.f32.mrb[0].mxu0
        %500 = vmatprep.mubr.f32.mxu0 0.0
        %501 = vmatmul.mubr.f32.gmra.mrb[0].mxu0 %v381
        %v502 = vpop.f32.mrb[0].mxu0
        %v503 = vadd.f32 %v404, %v502
        %v504 = vpop.f32.mrb[0].mxu0
        %505 = vmatprep.mubr.f32.mxu0 0.0
        %506 = vmatmul.mubr.f32.gmra.mrb[0].mxu0 %v382
        %v507 = vpop.f32.mrb[0].mxu0
        %v508 = vadd.f32 %v404, %v507
        %v509 = vpop.f32.mrb[0].mxu0
        %510 = vdwg.mxu0
        %511 = vst [vmem:[%s218] sm:$0xff] %v473
        %512 = vst [vmem:[%s218 + $0x8] sm:$0xff] %v478
        %513 = vst [vmem:[%s218 + $0x10] sm:$0xff] %v483
        %514 = vst [vmem:[%s218 + $0x18] sm:$0xff] %v488
        %515 = vst [vmem:[%s218 + $0x20] sm:$0xff] %v493
        %516 = vst [vmem:[%s218 + $0x28] sm:$0xff] %v498
        %517 = vst [vmem:[%s218 + $0x30] sm:$0xff] %v503
        %518 = vst [vmem:[%s218 + $0x38] sm:$0xff] %v508
        %s519 = sand.u32 %s137, 1
        %s520 = scalar_lea.sflag [#allocation3], %s519
        %s521 = sand.u32 %s137, 1
        %s522 = smul.addr %s521, 64
        %s523 = scalar_lea.vmem [#allocation2], %s522
        // Predicated region
        $region41: #{tpu_custom_call.1} parent=39 // pred_check
          %p524 = pneg %p147
        $region42: #{tpu_custom_call.1} parent=39 // pred_check_branch
          %526 = sbr.rel (%p524) target = $region44
        $region43: #{tpu_custom_call.1} parent=39 // pred_region
          %s527 = smul.u32 8, %s19
          %s529 = ssub.s32 1024, 1024
          %530 = vsyncadd %s520, %s529
          %s531 = smul.addr %s527, 128
          %s532 = scalar_lea.hbm %s5, %s531
          %s533 = sshll.u32 %s523, 4
          %s534 = int_to_ptr.vmem [resolvable:$true] %s533
          %539 = dma.vmem_to_hbm [thread:$0]  %s534, 1024, %s532, %s520, 128, 128, 8
        $region44: #{tpu_custom_call.1} parent=39 // pred_fallthru
          _
      $region40: #{tpu_custom_call.1} parent=5 // pred_fallthru
        _
      %p540 = scmp.le.s32.totalorder 2, %s14
      // Predicated region
      $region45: #{tpu_custom_call.1} parent=5 // pred_check
        %p541 = pneg %p540
      $region46: #{tpu_custom_call.1} parent=5 // pred_check_branch
        %543 = sbr.rel (%p541) target = $region48
      $region47: #{tpu_custom_call.1} parent=5 // pred_region
        %s544 = ssub.s32 %s14, 2
        // Predicated region
        $region49: #{tpu_custom_call.1} parent=47 // pred_check
          %p545 = pneg %p153
        $region50: #{tpu_custom_call.1} parent=47 // pred_check_branch
          %547 = sbr.rel (%p545) target = $region52
        $region51: #{tpu_custom_call.1} parent=47 // pred_region
          %s548 = sand.u32 %s138, 1
          %s549 = scalar_lea.sflag [#allocation3], %s548
          %s550 = sand.u32 %s138, 1
          %s551 = smul.addr %s550, 64
          %s552 = scalar_lea.vmem [#allocation2], %s551
          %553 = dma.done %s549, 1024
        $region52: #{tpu_custom_call.1} parent=47 // pred_fallthru
          _
      $region48: #{tpu_custom_call.1} parent=5 // pred_fallthru
        _
    $region6: #{tpu_custom_call.1} parent=1 // loop_footer
      %s18 = sadd.s32 1, %s14
    $region7: #{tpu_custom_call.1} parent=1 // loop_footer_branch
      %13 = sbr.rel target = $region3
    $region8: #{tpu_custom_call.1} parent=1 // loop_exit
      _
    %554 = vsyncpa [#allocation3], 1
    %s555 = scalar_lea.sflag [#allocation3], 1
    %556 = vsyncpa %s555, 1

</llo_original>
